<compile_context>
chip_gen: v6e
topology: v6e:2x2x1
jax: 0.10.0
libtpu: 0.0.40
codegen_flags: <defaults>
</compile_context>

<pallas_src>
import jax
import jax.numpy as jnp
from jax.experimental import pallas as pl
from jax.experimental.pallas import tpu as pltpu


def lstm_classifier_kernel(max_len_ref, xg_ref, len_ref, whh_ref,
                           w1_ref, b1_ref, w2_ref, b2_ref, out_ref):
    B = len_ref.shape[0]
    H = whh_ref.shape[0]

    max_len = max_len_ref[0]        # scalar int32 (SMEM)
    whh = whh_ref[...]              # (H, 4H), loaded once, VMEM resident
    # Hoist the lengths broadcast out of the recurrence (no per-step
    # broadcast_in_dim); per step only a vector-scalar compare remains.
    len_b = jnp.broadcast_to(len_ref[...], (B, H))   # (B, H) int32

    def step(t, carry):
        h, c = carry
        # x-projection + biases were precomputed; only the serial term here.
        gates = xg_ref[t] + jnp.dot(h, whh,
                                    preferred_element_type=jnp.float32)  # (B, 4H)
        # PyTorch LSTM gate order: i, f, g, o — 128-lane-aligned slices.
        i_g = jax.nn.sigmoid(gates[:, 0 * H:1 * H])
        f_g = jax.nn.sigmoid(gates[:, 1 * H:2 * H])
        g_g = jnp.tanh(gates[:, 2 * H:3 * H])
        o_g = jax.nn.sigmoid(gates[:, 3 * H:4 * H])
        c_new = f_g * c + i_g * g_g
        h_new = o_g * jnp.tanh(c_new)
        # packed-sequence masking: freeze the state once t >= lengths[b]
        valid = len_b > t                                  # (B, H) bool
        return jnp.where(valid, h_new, h), jnp.where(valid, c_new, c)

    h0 = jnp.zeros((B, H), jnp.float32)
    c0 = jnp.zeros((B, H), jnp.float32)
    h, _ = jax.lax.fori_loop(0, max_len, step, (h0, c0))

    # Fused MLP head: Linear(H, M1) -> ReLU -> Linear(M1, 1)
    z = jnp.dot(h, w1_ref[...], preferred_element_type=jnp.float32) + b1_ref[...]
    z = jnp.maximum(z, 0.0)
    logit = jnp.sum(z * w2_ref[...], axis=-1, keepdims=True) + b2_ref[...]
    out_ref[...] = logit


def lstm_classifier_forward(seq, lengths, params):
    """seq: (B, T) int32 token ids (0 = padding), lengths: (B,) int32."""
    emb_table = params["emb"]                      # (V, E), row 0 = padding
    W_ih, W_hh = params["W_ih"], params["W_hh"]    # (4H, E), (4H, H)
    b_ih, b_hh = params["b_ih"], params["b_hh"]    # (4H,)
    W1, b1 = params["W1"], params["b1"]            # (M1, H), (M1,)
    W2, b2 = params["W2"], params["b2"]            # (1, M1), (1,)

    B, T = seq.shape
    H = W_hh.shape[1]
    M1 = W1.shape[0]
    hp = jax.lax.Precision.HIGHEST

    # Glue: embedding gather (frozen table, padding_idx=0) + hoisted
    # input-to-hidden projection over all timesteps as ONE batched matmul,
    # emitted directly in time-major (T, B, 4H) layout for the kernel.
    emb = emb_table[seq].astype(jnp.float32)                         # (B, T, E)
    xg_t = jnp.einsum("bte,ge->tbg", emb, W_ih.astype(jnp.float32),
                      precision=hp)
    xg_t = xg_t + (b_ih + b_hh).astype(jnp.float32)                  # (T, B, 4H)

    lengths_i = lengths.astype(jnp.int32).reshape(B, 1)
    max_len = jnp.minimum(jnp.max(lengths), T).astype(jnp.int32).reshape(1)

    whh_t = W_hh.T.astype(jnp.float32)             # (H, 4H)
    w1_t = W1.T.astype(jnp.float32)                # (H, M1)
    b1_r = b1.reshape(1, M1).astype(jnp.float32)
    w2_r = W2.reshape(1, M1).astype(jnp.float32)   # row vector for lane-reduce head
    b2_r = b2.reshape(1, 1).astype(jnp.float32)

    vmem = pl.BlockSpec(memory_space=pltpu.MemorySpace.VMEM)
    smem = pl.BlockSpec(memory_space=pltpu.MemorySpace.SMEM)

    out = pl.pallas_call(
        lstm_classifier_kernel,
        out_shape=jax.ShapeDtypeStruct((B, 1), jnp.float32),
        in_specs=[smem,   # max_len (scalar bound for the recurrence)
                  vmem,   # X_gates (T, B, 4H)
                  vmem,   # lengths (B, 1) int32
                  vmem,   # W_hh^T
                  vmem,   # W1^T
                  vmem,   # b1
                  vmem,   # W2 row
                  vmem],  # b2
        out_specs=vmem,
    )(max_len, xg_t, lengths_i, whh_t, w1_t, b1_r, w2_r, b2_r)
    return out


def reference_forward(seq, lengths, params):
    """Pure-JAX reference reproducing the PyTorch forward."""
    hp = jax.lax.Precision.HIGHEST
    emb = params["emb"][seq].astype(jnp.float32)   # (B, T, E)
    B, T, _ = emb.shape
    H = params["W_hh"].shape[1]
    h = jnp.zeros((B, H), jnp.float32)
    c = jnp.zeros((B, H), jnp.float32)
    for t in range(T):
        x = emb[:, t, :]
        gates = (jnp.dot(x, params["W_ih"].T, precision=hp)
                 + jnp.dot(h, params["W_hh"].T, precision=hp)
                 + params["b_ih"] + params["b_hh"])
        i_g = jax.nn.sigmoid(gates[:, :H])
        f_g = jax.nn.sigmoid(gates[:, H:2 * H])
        g_g = jnp.tanh(gates[:, 2 * H:3 * H])
        o_g = jax.nn.sigmoid(gates[:, 3 * H:])
        c_new = f_g * c + i_g * g_g
        h_new = o_g * jnp.tanh(c_new)
        valid = (lengths > t)[:, None]
        h = jnp.where(valid, h_new, h)
        c = jnp.where(valid, c_new, c)
    z = jnp.maximum(jnp.dot(h, params["W1"].T, precision=hp) + params["b1"], 0.0)
    return jnp.dot(z, params["W2"].T, precision=hp) + params["b2"]


def make_params(key, vocab=20, E=32, H=128, M1=128):
    ks = jax.random.split(key, 9)
    scale = 0.1
    emb = jax.random.normal(ks[0], (vocab, E), jnp.float32) * scale
    emb = emb.at[0].set(0.0)                       # padding_idx=0
    return {
        "emb": emb,
        "W_ih": jax.random.normal(ks[1], (4 * H, E), jnp.float32) * scale,
        "W_hh": jax.random.normal(ks[2], (4 * H, H), jnp.float32) * scale,
        "b_ih": jax.random.normal(ks[3], (4 * H,), jnp.float32) * scale,
        "b_hh": jax.random.normal(ks[4], (4 * H,), jnp.float32) * scale,
        "W1": jax.random.normal(ks[5], (M1, H), jnp.float32) * scale,
        "b1": jax.random.normal(ks[6], (M1,), jnp.float32) * scale,
        "W2": jax.random.normal(ks[7], (1, M1), jnp.float32) * scale,
        "b2": jax.random.normal(ks[8], (1,), jnp.float32) * scale,
    }


if __name__ == "__main__":
    # batch=2, seq_len=8, embed_dim=32, lstm_hidden=128 (module default),
    # mlp_hidden=[128] (module default)
    B, T, V, E, H, M1 = 2, 8, 20, 32, 128, 128
    key = jax.random.PRNGKey(0)
    k_seq, k_param = jax.random.split(key)

    params = make_params(k_param, vocab=V, E=E, H=H, M1=M1)

    lengths = jnp.array([8, 5], dtype=jnp.int32)
    seq = jax.random.randint(k_seq, (B, T), 1, V, dtype=jnp.int32)
    # zero-pad past each sequence's length (padding_idx = 0)
    pos = jnp.arange(T)[None, :]
    seq = jnp.where(pos < lengths[:, None], seq, 0)
    # mask (second element of the PyTorch input tuple) — unused by the forward
    mask = (pos < lengths[:, None]).astype(jnp.float32)

    out = lstm_classifier_forward(seq, lengths, params)
    out = jax.block_until_ready(out)

    ref = reference_forward(seq, lengths, params)
    assert out.shape == (B, 1)
    assert jnp.allclose(out, ref, atol=1e-4, rtol=1e-4), (out, ref)

    print("KERNEL_OK")
</pallas_src>

<mosaic_0001>
module attributes {stable_mosaic.version = 11 : i64} {
  func.func @lstm_classifier_kernel(%arg0: memref<1xi32, #tpu.memory_space<smem>>, %arg1: memref<8x2x512xf32, #tpu.memory_space<vmem>>, %arg2: memref<2x1xi32, #tpu.memory_space<vmem>>, %arg3: memref<128x512xf32, #tpu.memory_space<vmem>>, %arg4: memref<128x128xf32, #tpu.memory_space<vmem>>, %arg5: memref<1x128xf32, #tpu.memory_space<vmem>>, %arg6: memref<1x128xf32, #tpu.memory_space<vmem>>, %arg7: memref<1x1xf32, #tpu.memory_space<vmem>>, %arg8: memref<2x1xf32, #tpu.memory_space<vmem>>) attributes {dimension_semantics = [], scalar_prefetch = 0 : i64, scratch_operands = 0 : i64, tpu.core_type = #tpu.core_type<tc>} {
    %c0 = arith.constant 0 : index
    %0 = memref.load %arg0[%c0] : memref<1xi32, #tpu.memory_space<smem>>
    %c0_0 = arith.constant 0 : index
    %c0_1 = arith.constant 0 : index
    %1 = vector.load %arg3[%c0_0, %c0_1] : memref<128x512xf32, #tpu.memory_space<vmem>>, vector<128x512xf32>
    %c0_2 = arith.constant 0 : index
    %c0_3 = arith.constant 0 : index
    %2 = vector.load %arg2[%c0_2, %c0_3] : memref<2x1xi32, #tpu.memory_space<vmem>>, vector<2x1xi32>
    %3 = vector.shape_cast %2 : vector<2x1xi32> to vector<2x1xi32>
    %4 = vector.broadcast %3 : vector<2x1xi32> to vector<2x128xi32>
    %cst = arith.constant 0.000000e+00 : f32
    %5 = vector.broadcast %cst : f32 to vector<2x128xf32>
    %cst_4 = arith.constant 0.000000e+00 : f32
    %6 = vector.broadcast %cst_4 : f32 to vector<2x128xf32>
    %c0_i32 = arith.constant 0 : i32
    %7 = arith.subi %0, %c0_i32 : i32
    %8 = arith.addi %c0_i32, %7 : i32
    %c1_i32 = arith.constant 1 : i32
    %9:2 = scf.for %arg9 = %c0_i32 to %8 step %c1_i32 iter_args(%arg10 = %5, %arg11 = %6) -> (vector<2x128xf32>, vector<2x128xf32>)  : i32 {
      %26 = arith.index_cast %arg9 : i32 to index
      %c0_18 = arith.constant 0 : index
      %c0_19 = arith.constant 0 : index
      %27 = vector.load %arg1[%26, %c0_18, %c0_19] : memref<8x2x512xf32, #tpu.memory_space<vmem>>, vector<1x2x512xf32>
      %28 = vector.shape_cast %27 : vector<1x2x512xf32> to vector<2x512xf32>
      %cst_20 = arith.constant dense<0.000000e+00> : vector<2x512xf32>
      %29 = tpu.matmul %arg10, %1, %cst_20 {dimension_numbers = #tpu.dot_dimension_numbers<[1], [0], [0], [1], [0, 0, 1, 1], [], []>} : vector<2x128xf32>, vector<128x512xf32>, vector<2x512xf32> -> vector<2x512xf32>
      %30 = arith.addf %28, %29 : vector<2x512xf32>
      %31 = vector.extract_strided_slice %30 {offsets = [0, 0], sizes = [2, 128], strides = [1, 1]} : vector<2x512xf32> to vector<2x128xf32>
      %32 = arith.negf %31 : vector<2x128xf32>
      %33 = math.exp %32 : vector<2x128xf32>
      %cst_21 = arith.constant 1.000000e+00 : f32
      %34 = vector.broadcast %cst_21 : f32 to vector<2x128xf32>
      %35 = arith.addf %34, %33 : vector<2x128xf32>
      %36 = arith.divf %34, %35 : vector<2x128xf32>
      %37 = vector.extract_strided_slice %30 {offsets = [0, 128], sizes = [2, 128], strides = [1, 1]} : vector<2x512xf32> to vector<2x128xf32>
      %38 = arith.negf %37 : vector<2x128xf32>
      %39 = math.exp %38 : vector<2x128xf32>
      %cst_22 = arith.constant 1.000000e+00 : f32
      %40 = vector.broadcast %cst_22 : f32 to vector<2x128xf32>
      %41 = arith.addf %40, %39 : vector<2x128xf32>
      %42 = arith.divf %40, %41 : vector<2x128xf32>
      %43 = vector.extract_strided_slice %30 {offsets = [0, 256], sizes = [2, 128], strides = [1, 1]} : vector<2x512xf32> to vector<2x128xf32>
      %44 = math.tanh %43 : vector<2x128xf32>
      %45 = vector.extract_strided_slice %30 {offsets = [0, 384], sizes = [2, 128], strides = [1, 1]} : vector<2x512xf32> to vector<2x128xf32>
      %46 = arith.negf %45 : vector<2x128xf32>
      %47 = math.exp %46 : vector<2x128xf32>
      %cst_23 = arith.constant 1.000000e+00 : f32
      %48 = vector.broadcast %cst_23 : f32 to vector<2x128xf32>
      %49 = arith.addf %48, %47 : vector<2x128xf32>
      %50 = arith.divf %48, %49 : vector<2x128xf32>
      %51 = arith.mulf %42, %arg11 : vector<2x128xf32>
      %52 = arith.mulf %36, %44 : vector<2x128xf32>
      %53 = arith.addf %51, %52 : vector<2x128xf32>
      %54 = math.tanh %53 : vector<2x128xf32>
      %55 = arith.mulf %50, %54 : vector<2x128xf32>
      %56 = vector.broadcast %arg9 : i32 to vector<2x128xi32>
      %57 = arith.cmpi sgt, %4, %56 : vector<2x128xi32>
      %58 = arith.select %57, %55, %arg10 : vector<2x128xi1>, vector<2x128xf32>
      %59 = arith.select %57, %53, %arg11 : vector<2x128xi1>, vector<2x128xf32>
      scf.yield %58, %59 : vector<2x128xf32>, vector<2x128xf32>
    }
    %c0_5 = arith.constant 0 : index
    %c0_6 = arith.constant 0 : index
    %10 = vector.load %arg4[%c0_5, %c0_6] : memref<128x128xf32, #tpu.memory_space<vmem>>, vector<128x128xf32>
    %cst_7 = arith.constant dense<0.000000e+00> : vector<2x128xf32>
    %11 = tpu.matmul %9#0, %10, %cst_7 {dimension_numbers = #tpu.dot_dimension_numbers<[1], [0], [0], [1], [0, 0, 1, 1], [], []>} : vector<2x128xf32>, vector<128x128xf32>, vector<2x128xf32> -> vector<2x128xf32>
    %c0_8 = arith.constant 0 : index
    %c0_9 = arith.constant 0 : index
    %12 = vector.load %arg5[%c0_8, %c0_9] : memref<1x128xf32, #tpu.memory_space<vmem>>, vector<1x128xf32>
    %13 = vector.broadcast %12 : vector<1x128xf32> to vector<2x128xf32>
    %14 = arith.addf %11, %13 : vector<2x128xf32>
    %cst_10 = arith.constant 0.000000e+00 : f32
    %15 = vector.broadcast %cst_10 : f32 to vector<2x128xf32>
    %16 = arith.maximumf %14, %15 : vector<2x128xf32>
    %c0_11 = arith.constant 0 : index
    %c0_12 = arith.constant 0 : index
    %17 = vector.load %arg6[%c0_11, %c0_12] : memref<1x128xf32, #tpu.memory_space<vmem>>, vector<1x128xf32>
    %18 = vector.broadcast %17 : vector<1x128xf32> to vector<2x128xf32>
    %19 = arith.mulf %16, %18 : vector<2x128xf32>
    %cst_13 = arith.constant dense<0.000000e+00> : vector<2xf32>
    %20 = vector.multi_reduction <add>, %19, %cst_13 [1] : vector<2x128xf32> to vector<2xf32>
    %21 = vector.shape_cast %20 : vector<2xf32> to vector<2x1xf32>
    %c0_14 = arith.constant 0 : index
    %c0_15 = arith.constant 0 : index
    %22 = vector.load %arg7[%c0_14, %c0_15] : memref<1x1xf32, #tpu.memory_space<vmem>>, vector<1x1xf32>
    %23 = vector.broadcast %22 : vector<1x1xf32> to vector<2x1xf32>
    %24 = arith.addf %21, %23 : vector<2x1xf32>
    %c0_16 = arith.constant 0 : index
    %c0_17 = arith.constant 0 : index
    %25 = vector.load %arg8[%c0_16, %c0_17] : memref<2x1xf32, #tpu.memory_space<vmem>>, vector<2x1xf32>
    tpu.vector_store %arg8[%c0_16, %c0_17], %24 {strides = array<i32>} : memref<2x1xf32, #tpu.memory_space<vmem>>, vector<2x1xf32>,
    return
  }
}

</mosaic_0001>

<llo_original>
// kernel: tpu_custom_call.1
$region0: #{tpu_custom_call.1}
  #allocation0 [shape = 'u32[]', space=smem, size = 0x4, offset = 0x4, fixed_abs, tag = 'smem constant byte address 0x4 - core index']
  #allocation1 [shape = 'u32[144,128]{1,0:T(1,128)}', space=vmem, size = 0x12000, scoped, tag = 'internal scratch']
  #allocation2 [shape = 's32[1]{0:T(128)S(6)}', space=smem, size = 0x200, scoped, tag = 'scoped memory for tpu_custom_call.1']
  #allocation3 [shape = 'f32[1,1]{1,0:T(1,128)S(1)}', space=vmem, size = 0x200, scoped, tag = 'scoped memory for tpu_custom_call.1']
  %s0 = inlined_call_operand.<no memory space> [shape: s32[1], index: 0, kind: input, shape index: {}]
  %s1 = inlined_call_operand.hbm [shape: f32[8,2,512], index: 1, kind: input, shape index: {}]
  %s2 = inlined_call_operand.vmem [shape: s32[2,1], index: 2, kind: input, shape index: {}]
  %s3 = inlined_call_operand.hbm [shape: f32[128,512], index: 3, kind: input, shape index: {}]
  %s4 = inlined_call_operand.hbm [shape: f32[128,128], index: 4, kind: input, shape index: {}]
  %s5 = inlined_call_operand.vmem [shape: f32[1,128], index: 5, kind: input, shape index: {}]
  %s6 = inlined_call_operand.vmem [shape: f32[1,128], index: 6, kind: input, shape index: {}]
  %s7 = inlined_call_operand.<no memory space> [shape: f32[1,1], index: 7, kind: input, shape index: {}]
  %s8 = inlined_call_operand.vmem [shape: f32[2,1], index: 8, kind: output, shape index: {}]
  %s9 = sld [smem:[#allocation0]]
  $region61: #{tpu_custom_call.1} parent=0
    _
  %s11 = ssub.s32 1, %s9
  %s12 = scalar_select 0, %s11, %s9
  %13 = sst [smem:[#allocation2]] %s0
  %v14 = vstv %s7
  %15 = vst [vmem:[#allocation3] sm:$0x1] %v14
  $region1: #{tpu_custom_call.1} parent=0
    #allocation4 [shape = 'u8[32768]{0}', space=vmem, size = 0x8000, scoped, tag = 'input window, operand 1, single buffered']
    #allocation5 [shape = 's32[1]{0}', space=sflag, size = 0x4, scoped, tag = 'scoped memory for tpu_custom_call.1']
    #allocation6 [shape = 'u8[262144]{0}', space=vmem, size = 0x40000, scoped, tag = 'input window, operand 3, single buffered']
    #allocation7 [shape = 's32[1]{0}', space=sflag, size = 0x4, scoped, tag = 'scoped memory for tpu_custom_call.1']
    #allocation8 [shape = 'u8[65536]{0}', space=vmem, size = 0x10000, scoped, tag = 'input window, operand 4, single buffered']
    %16 = vsyncpa [#allocation5], 0
    %17 = vsyncpa [#allocation7], 0
    // Predicated region
    $region2: #{tpu_custom_call.1} parent=1 // pred_check
      _
    $region3: #{tpu_custom_call.1} parent=1 // pred_check_branch
      %19 = sbr.rel (0) target = $region5
    $region4: #{tpu_custom_call.1} parent=1 // pred_region
      _
    $region5: #{tpu_custom_call.1} parent=1 // pred_fallthru
      _
    // Predicated region
    $region6: #{tpu_custom_call.1} parent=1 // pred_check
      _
    $region7: #{tpu_custom_call.1} parent=1 // pred_check_branch
      %21 = sbr.rel (0) target = $region9
    $region8: #{tpu_custom_call.1} parent=1 // pred_region
      %s23 = ssub.s32 1024, 1024
      %24 = vsyncadd [#allocation5], %s23
      %s25 = sshll.u32 [#allocation4], 4
      %s26 = int_to_ptr.vmem [resolvable:$true] %s25
      %31 = dma.hbm_to_vmem [thread:$0]  %s1, 1024, %s26, [#allocation5], 128, 128, 8
    $region9: #{tpu_custom_call.1} parent=1 // pred_fallthru
      _
    // Predicated region
    $region10: #{tpu_custom_call.1} parent=1 // pred_check
      _
    $region11: #{tpu_custom_call.1} parent=1 // pred_check_branch
      %33 = sbr.rel (0) target = $region13
    $region12: #{tpu_custom_call.1} parent=1 // pred_region
      _
    $region13: #{tpu_custom_call.1} parent=1 // pred_fallthru
      _
    // Predicated region
    $region14: #{tpu_custom_call.1} parent=1 // pred_check
      _
    $region15: #{tpu_custom_call.1} parent=1 // pred_check_branch
      %35 = sbr.rel (0) target = $region17
    $region16: #{tpu_custom_call.1} parent=1 // pred_region
      %s37 = ssub.s32 8192, 8192
      %38 = vsyncadd [#allocation7], %s37
      %s39 = sshll.u32 [#allocation6], 4
      %s40 = int_to_ptr.vmem [resolvable:$true] %s39
      %45 = dma.hbm_to_vmem [thread:$0]  %s3, 8192, %s40, [#allocation7], 512, 512, 32
    $region17: #{tpu_custom_call.1} parent=1 // pred_fallthru
      _
    // Predicated region
    $region18: #{tpu_custom_call.1} parent=1 // pred_check
      _
    $region19: #{tpu_custom_call.1} parent=1 // pred_check_branch
      %47 = sbr.rel (0) target = $region21
    $region20: #{tpu_custom_call.1} parent=1 // pred_region
      %s49 = ssub.s32 2048, 2048
      %50 = vsyncadd [#allocation7], %s49
      %s51 = sshll.u32 [#allocation8], 4
      %s52 = int_to_ptr.vmem [resolvable:$true] %s51
      %57 = dma.hbm_to_vmem [thread:$0]  %s4, 2048, %s52, [#allocation7], 128, 128, 8
    $region21: #{tpu_custom_call.1} parent=1 // pred_fallthru
      _
    // Predicated region
    $region22: #{tpu_custom_call.1} parent=1 // pred_check
      _
    $region23: #{tpu_custom_call.1} parent=1 // pred_check_branch
      %59 = sbr.rel (0) target = $region25
    $region24: #{tpu_custom_call.1} parent=1 // pred_region
      _
    $region25: #{tpu_custom_call.1} parent=1 // pred_fallthru
      _
    // Predicated region
    $region26: #{tpu_custom_call.1} parent=1 // pred_check
      _
    $region27: #{tpu_custom_call.1} parent=1 // pred_check_branch
      %61 = sbr.rel (0) target = $region29
    $region28: #{tpu_custom_call.1} parent=1 // pred_region
      _
    $region29: #{tpu_custom_call.1} parent=1 // pred_fallthru
      _
    // Predicated region
    $region30: #{tpu_custom_call.1} parent=1 // pred_check
      _
    $region31: #{tpu_custom_call.1} parent=1 // pred_check_branch
      %63 = sbr.rel (0) target = $region33
    $region32: #{tpu_custom_call.1} parent=1 // pred_region
      _
    $region33: #{tpu_custom_call.1} parent=1 // pred_fallthru
      _
    // Predicated region
    $region34: #{tpu_custom_call.1} parent=1 // pred_check
      _
    $region35: #{tpu_custom_call.1} parent=1 // pred_check_branch
      %65 = sbr.rel (0) target = $region37
    $region36: #{tpu_custom_call.1} parent=1 // pred_region
      %66 = dma.done [#allocation5], 1024
    $region37: #{tpu_custom_call.1} parent=1 // pred_fallthru
      _
    // Predicated region
    $region38: #{tpu_custom_call.1} parent=1 // pred_check
      _
    $region39: #{tpu_custom_call.1} parent=1 // pred_check_branch
      %68 = sbr.rel (0) target = $region41
    $region40: #{tpu_custom_call.1} parent=1 // pred_region
      %69 = dma.done [#allocation7], 8192
    $region41: #{tpu_custom_call.1} parent=1 // pred_fallthru
      _
    // Predicated region
    $region42: #{tpu_custom_call.1} parent=1 // pred_check
      _
    $region43: #{tpu_custom_call.1} parent=1 // pred_check_branch
      %71 = sbr.rel (0) target = $region45
    $region44: #{tpu_custom_call.1} parent=1 // pred_region
      %72 = dma.done [#allocation7], 2048
    $region45: #{tpu_custom_call.1} parent=1 // pred_fallthru
      _
    %s73 = sld [smem:[#allocation2]]
    %v74 = vld [vmem:[#allocation6] sm:$0xff]
    %v75 = vld [vmem:[#allocation6 + $0x8] sm:$0xff]
    %v76 = vld [vmem:[#allocation6 + $0x10] sm:$0xff]
    %v77 = vld [vmem:[#allocation6 + $0x18] sm:$0xff]
    %v78 = vld [vmem:[#allocation6 + $0x20] sm:$0xff]
    %v79 = vld [vmem:[#allocation6 + $0x28] sm:$0xff]
    %v80 = vld [vmem:[#allocation6 + $0x30] sm:$0xff]
    %v81 = vld [vmem:[#allocation6 + $0x38] sm:$0xff]
    %v82 = vld [vmem:[#allocation6 + $0x40] sm:$0xff]
    %v83 = vld [vmem:[#allocation6 + $0x48] sm:$0xff]
    %v84 = vld [vmem:[#allocation6 + $0x50] sm:$0xff]
    %v85 = vld [vmem:[#allocation6 + $0x58] sm:$0xff]
    %v86 = vld [vmem:[#allocation6 + $0x60] sm:$0xff]
    %v87 = vld [vmem:[#allocation6 + $0x68] sm:$0xff]
    %v88 = vld [vmem:[#allocation6 + $0x70] sm:$0xff]
    %v89 = vld [vmem:[#allocation6 + $0x78] sm:$0xff]
    %v90 = vld [vmem:[#allocation6 + $0x80] sm:$0xff]
    %v91 = vld [vmem:[#allocation6 + $0x88] sm:$0xff]
    %v92 = vld [vmem:[#allocation6 + $0x90] sm:$0xff]
    %v93 = vld [vmem:[#allocation6 + $0x98] sm:$0xff]
    %v94 = vld [vmem:[#allocation6 + $0xa0] sm:$0xff]
    %v95 = vld [vmem:[#allocation6 + $0xa8] sm:$0xff]
    %v96 = vld [vmem:[#allocation6 + $0xb0] sm:$0xff]
    %v97 = vld [vmem:[#allocation6 + $0xb8] sm:$0xff]
    %v98 = vld [vmem:[#allocation6 + $0xc0] sm:$0xff]
    %v99 = vld [vmem:[#allocation6 + $0xc8] sm:$0xff]
    %v100 = vld [vmem:[#allocation6 + $0xd0] sm:$0xff]
    %v101 = vld [vmem:[#allocation6 + $0xd8] sm:$0xff]
    %v102 = vld [vmem:[#allocation6 + $0xe0] sm:$0xff]
    %v103 = vld [vmem:[#allocation6 + $0xe8] sm:$0xff]
    %v104 = vld [vmem:[#allocation6 + $0xf0] sm:$0xff]
    %v105 = vld [vmem:[#allocation6 + $0xf8] sm:$0xff]
    %v106 = vld [vmem:[#allocation6 + $0x100] sm:$0xff]
    %v107 = vld [vmem:[#allocation6 + $0x108] sm:$0xff]
    %v108 = vld [vmem:[#allocation6 + $0x110] sm:$0xff]
    %v109 = vld [vmem:[#allocation6 + $0x118] sm:$0xff]
    %v110 = vld [vmem:[#allocation6 + $0x120] sm:$0xff]
    %v111 = vld [vmem:[#allocation6 + $0x128] sm:$0xff]
    %v112 = vld [vmem:[#allocation6 + $0x130] sm:$0xff]
    %v113 = vld [vmem:[#allocation6 + $0x138] sm:$0xff]
    %v114 = vld [vmem:[#allocation6 + $0x140] sm:$0xff]
    %v115 = vld [vmem:[#allocation6 + $0x148] sm:$0xff]
    %v116 = vld [vmem:[#allocation6 + $0x150] sm:$0xff]
    %v117 = vld [vmem:[#allocation6 + $0x158] sm:$0xff]
    %v118 = vld [vmem:[#allocation6 + $0x160] sm:$0xff]
    %v119 = vld [vmem:[#allocation6 + $0x168] sm:$0xff]
    %v120 = vld [vmem:[#allocation6 + $0x170] sm:$0xff]
    %v121 = vld [vmem:[#allocation6 + $0x178] sm:$0xff]
    %v122 = vld [vmem:[#allocation6 + $0x180] sm:$0xff]
    %v123 = vld [vmem:[#allocation6 + $0x188] sm:$0xff]
    %v124 = vld [vmem:[#allocation6 + $0x190] sm:$0xff]
    %v125 = vld [vmem:[#allocation6 + $0x198] sm:$0xff]
    %v126 = vld [vmem:[#allocation6 + $0x1a0] sm:$0xff]
    %v127 = vld [vmem:[#allocation6 + $0x1a8] sm:$0xff]
    %v128 = vld [vmem:[#allocation6 + $0x1b0] sm:$0xff]
    %v129 = vld [vmem:[#allocation6 + $0x1b8] sm:$0xff]
    %v130 = vld [vmem:[#allocation6 + $0x1c0] sm:$0xff]
    %v131 = vld [vmem:[#allocation6 + $0x1c8] sm:$0xff]
    %v132 = vld [vmem:[#allocation6 + $0x1d0] sm:$0xff]
    %v133 = vld [vmem:[#allocation6 + $0x1d8] sm:$0xff]
    %v134 = vld [vmem:[#allocation6 + $0x1e0] sm:$0xff]
    %v135 = vld [vmem:[#allocation6 + $0x1e8] sm:$0xff]
    %v136 = vld [vmem:[#allocation6 + $0x1f0] sm:$0xff]
    %v137 = vld [vmem:[#allocation6 + $0x1f8] sm:$0xff]
    %v138 = vld [vmem:[%s2] sm:$0x3]
    %139 = vset.pattern.permute.xlu0 0
    %140 = vperm.xlu0 %139, %v138
    %v141 = vpop.permute.xlu0 %140
    // While loop
    $region46: #{tpu_custom_call.1} parent=1 // loop_pre_header
      _
    $region47: #{tpu_custom_call.1} parent=1 // loop_header
      %s143 = sphi 0, %s145
      %p144 = scmp.ge.s32.totalorder %s143, %s73
      %v148 = vphi 0.0, %v352
      %v149 = vphi 0.0, %v353
    $region48: #{tpu_custom_call.1} parent=1 // loop_header_branch
      %147 = sbr.rel (%p144) target = $region52
    $region49: #{tpu_custom_call.1} parent=1 // loop_body
      %s150 = smul.u32 %s143, 4
      %s151 = smul.addr %s150, 2
      %s152 = scalar_lea.vmem [#allocation4], %s151
      %v153 = vld [vmem:[%s152] sm:$0xff]
      %154 = vmatprep.subr.mxu0 %v135
      %155 = vmatpush1.msra.mxu0 %v134
      %156 = vmatprep.subr.mxu0 %v131
      %157 = vmatpush1.msra.mxu0 %v130
      %158 = vmatprep.subr.mxu0 %v127
      %159 = vmatpush1.msra.mxu0 %v126
      %160 = vmatprep.subr.mxu0 %v123
      %161 = vmatpush1.msra.mxu0 %v122
      %162 = vmatprep.subr.mxu0 %v119
      %163 = vmatpush1.msra.mxu0 %v118
      %164 = vmatprep.subr.mxu0 %v115
      %165 = vmatpush1.msra.mxu0 %v114
      %166 = vmatprep.subr.mxu0 %v111
      %167 = vmatpush1.msra.mxu0 %v110
      %168 = vmatprep.subr.mxu0 %v107
      %169 = vmatpush1.msra.mxu0 %v106
      %170 = vmatprep.subr.mxu0 %v103
      %171 = vmatpush1.msra.mxu0 %v102
      %172 = vmatprep.subr.mxu0 %v99
      %173 = vmatpush1.msra.mxu0 %v98
      %174 = vmatprep.subr.mxu0 %v95
      %175 = vmatpush1.msra.mxu0 %v94
      %176 = vmatprep.subr.mxu0 %v91
      %177 = vmatpush1.msra.mxu0 %v90
      %178 = vmatprep.subr.mxu0 %v87
      %179 = vmatpush1.msra.mxu0 %v86
      %180 = vmatprep.subr.mxu0 %v83
      %181 = vmatpush1.msra.mxu0 %v82
      %182 = vmatprep.subr.mxu0 %v79
      %183 = vmatpush1.msra.mxu0 %v78
      %184 = vmatprep.subr.mxu0 %v75
      %185 = vmatpush1.msra.mxu0 %v74
      %186 = vmatprep.subr.mxu0 0.0
      %187 = vmatpush2.msra.mxu0 0.0
      %188 = vmatprep.subr.mxu0 0.0
      %189 = vmatpush2.msra.mxu0 0.0
      %190 = vmatprep.subr.mxu0 0.0
      %191 = vmatpush2.msra.mxu0 0.0
      %192 = vmatprep.subr.mxu0 0.0
      %193 = vmatpush2.msra.mxu0 0.0
      %194 = vmatprep.subr.mxu0 0.0
      %195 = vmatpush2.msra.mxu0 0.0
      %196 = vmatprep.subr.mxu0 0.0
      %197 = vmatpush2.msra.mxu0 0.0
      %198 = vmatprep.subr.mxu0 0.0
      %199 = vmatpush2.msra.mxu0 0.0
      %200 = vmatprep.subr.mxu0 0.0
      %201 = vmatpush2.msra.mxu0 0.0
      %202 = vmatprep.subr.mxu0 0.0
      %203 = vmatpush2.msra.mxu0 0.0
      %204 = vmatprep.subr.mxu0 0.0
      %205 = vmatpush2.msra.mxu0 0.0
      %206 = vmatprep.subr.mxu0 0.0
      %207 = vmatpush2.msra.mxu0 0.0
      %208 = vmatprep.subr.mxu0 0.0
      %209 = vmatpush2.msra.mxu0 0.0
      %210 = vmatprep.subr.mxu0 0.0
      %211 = vmatpush2.msra.mxu0 0.0
      %212 = vmatprep.subr.mxu0 0.0
      %213 = vmatpush2.msra.mxu0 0.0
      %214 = vmatprep.subr.mxu0 0.0
      %215 = vmatpush2.msra.mxu0 0.0
      %216 = vmatprep.subr.mxu0 0.0
      %217 = vmatpush2.msra.mxu0 0.0
      %218 = vmatprep.mubr.f32.mxu0 0.0
      %219 = vmatmul.mubr.f32.gmra.mxu0 %v148
      %v220 = vpop.f32.mrf.mxu0
      %v221 = vadd.f32 0.0, %v220
      %v222 = vpop.f32.mrf.mxu0
      %v223 = vadd.f32 0.0, %v222
      %224 = vdwg.mxu0
      %225 = vmatprep.subr.mxu0 %v137
      %226 = vmatpush1.msra.mxu0 %v136
      %227 = vmatprep.subr.mxu0 %v133
      %228 = vmatpush1.msra.mxu0 %v132
      %229 = vmatprep.subr.mxu0 %v129
      %230 = vmatpush1.msra.mxu0 %v128
      %231 = vmatprep.subr.mxu0 %v125
      %232 = vmatpush1.msra.mxu0 %v124
      %233 = vmatprep.subr.mxu0 %v121
      %234 = vmatpush1.msra.mxu0 %v120
      %235 = vmatprep.subr.mxu0 %v117
      %236 = vmatpush1.msra.mxu0 %v116
      %237 = vmatprep.subr.mxu0 %v113
      %238 = vmatpush1.msra.mxu0 %v112
      %239 = vmatprep.subr.mxu0 %v109
      %240 = vmatpush1.msra.mxu0 %v108
      %241 = vmatprep.subr.mxu0 %v105
      %242 = vmatpush1.msra.mxu0 %v104
      %243 = vmatprep.subr.mxu0 %v101
      %244 = vmatpush1.msra.mxu0 %v100
      %245 = vmatprep.subr.mxu0 %v97
      %246 = vmatpush1.msra.mxu0 %v96
      %247 = vmatprep.subr.mxu0 %v93
      %248 = vmatpush1.msra.mxu0 %v92
      %249 = vmatprep.subr.mxu0 %v89
      %250 = vmatpush1.msra.mxu0 %v88
      %251 = vmatprep.subr.mxu0 %v85
      %252 = vmatpush1.msra.mxu0 %v84
      %253 = vmatprep.subr.mxu0 %v81
      %254 = vmatpush1.msra.mxu0 %v80
      %255 = vmatprep.subr.mxu0 %v77
      %256 = vmatpush1.msra.mxu0 %v76
      %257 = vmatprep.subr.mxu0 0.0
      %258 = vmatpush2.msra.mxu0 0.0
      %259 = vmatprep.subr.mxu0 0.0
      %260 = vmatpush2.msra.mxu0 0.0
      %261 = vmatprep.subr.mxu0 0.0
      %262 = vmatpush2.msra.mxu0 0.0
      %263 = vmatprep.subr.mxu0 0.0
      %264 = vmatpush2.msra.mxu0 0.0
      %265 = vmatprep.subr.mxu0 0.0
      %266 = vmatpush2.msra.mxu0 0.0
      %267 = vmatprep.subr.mxu0 0.0
      %268 = vmatpush2.msra.mxu0 0.0
      %269 = vmatprep.subr.mxu0 0.0
      %270 = vmatpush2.msra.mxu0 0.0
      %271 = vmatprep.subr.mxu0 0.0
      %272 = vmatpush2.msra.mxu0 0.0
      %273 = vmatprep.subr.mxu0 0.0
      %274 = vmatpush2.msra.mxu0 0.0
      %275 = vmatprep.subr.mxu0 0.0
      %276 = vmatpush2.msra.mxu0 0.0
      %277 = vmatprep.subr.mxu0 0.0
      %278 = vmatpush2.msra.mxu0 0.0
      %279 = vmatprep.subr.mxu0 0.0
      %280 = vmatpush2.msra.mxu0 0.0
      %281 = vmatprep.subr.mxu0 0.0
      %282 = vmatpush2.msra.mxu0 0.0
      %283 = vmatprep.subr.mxu0 0.0
      %284 = vmatpush2.msra.mxu0 0.0
      %285 = vmatprep.subr.mxu0 0.0
      %286 = vmatpush2.msra.mxu0 0.0
      %287 = vmatprep.subr.mxu0 0.0
      %288 = vmatpush2.msra.mxu0 0.0
      %289 = vmatprep.mubr.f32.mxu0 0.0
      %290 = vmatmul.mubr.f32.gmra.mxu0 %v148
      %v291 = vpop.f32.mrf.mxu0
      %v292 = vadd.f32 0.0, %v291
      %v293 = vpop.f32.mrf.mxu0
      %v294 = vadd.f32 0.0, %v293
      %295 = vdwg.mxu0
      %v300 = vcombine.low %v221, %v223
      %v301 = vcombine.low %v292, %v294
      %v303 = vunpack.c.l.s4 1983009808
      %v304 = vunpack.c.0.s8 %v303
      %v305 = vlaneseq
      %v306 = vshrl.u32 %v305, 7
      %v307 = vsub.s32 %v304, %v306
      %v308 = vrot.slane %v300, %v307
      %v310 = vunpack.c.l.s4 1983009808
      %v311 = vunpack.c.0.s8 %v310
      %v312 = vlaneseq
      %v313 = vshrl.u32 %v312, 7
      %v314 = vsub.s32 %v311, %v313
      %v315 = vrot.slane %v301, %v314
      %v316 = vcombine.low %v308, %v315
      %v318 = vadd.f32 %v153, %v316
      %v319 = vxor.u32 %v318, 2147483648
      %v320 = vmul.f32 %v319, 1.442695
      %v321 = vpow.pop %v320
      %v322 = vadd.f32 %v321, 1.0
      %v323 = vrcp.pop %v322
      %v324 = vmul.f32 1.0, %v323
      %v326 = vrot.slane %v318, 2
      %v328 = vxor.u32 %v326, 2147483648
      %v329 = vmul.f32 %v328, 1.442695
      %v330 = vpow.pop %v329
      %v331 = vadd.f32 %v330, 1.0
      %v332 = vrcp.pop %v331
      %v333 = vmul.f32 1.0, %v332
      %v334 = vrot.slane %v318, 4
      %v336 = vtanh.pop %v334
      %v337 = vrot.slane %v318, 6
      %v339 = vxor.u32 %v337, 2147483648
      %v340 = vmul.f32 %v339, 1.442695
      %v341 = vpow.pop %v340
      %v342 = vadd.f32 %v341, 1.0
      %v343 = vrcp.pop %v342
      %v344 = vmul.f32 1.0, %v343
      %v345 = vmul.f32 %v333, %v149
      %v346 = vmul.f32 %v324, %v336
      %v347 = vadd.f32 %v345, %v346
      %v348 = vtanh.pop %v347
      %v349 = vmul.f32 %v344, %v348
      %v350 = vstv %s143
      %vm351 = vcmp.gt.s32.totalorder %v141, %v350
      %v352 = vsel %vm351, %v349, %v148
      %v353 = vsel %vm351, %v347, %v149
    $region50: #{tpu_custom_call.1} parent=1 // loop_footer
      %s145 = sadd.s32 %s143, 1
    $region51: #{tpu_custom_call.1} parent=1 // loop_footer_branch
      %142 = sbr.rel target = $region47
    $region52: #{tpu_custom_call.1} parent=1 // loop_exit
      _
    %v354 = vld [vmem:[#allocation8] sm:$0xff]
    %v355 = vld [vmem:[#allocation8 + $0x8] sm:$0xff]
    %v356 = vld [vmem:[#allocation8 + $0x10] sm:$0xff]
    %v357 = vld [vmem:[#allocation8 + $0x18] sm:$0xff]
    %v358 = vld [vmem:[#allocation8 + $0x20] sm:$0xff]
    %v359 = vld [vmem:[#allocation8 + $0x28] sm:$0xff]
    %v360 = vld [vmem:[#allocation8 + $0x30] sm:$0xff]
    %v361 = vld [vmem:[#allocation8 + $0x38] sm:$0xff]
    %v362 = vld [vmem:[#allocation8 + $0x40] sm:$0xff]
    %v363 = vld [vmem:[#allocation8 + $0x48] sm:$0xff]
    %v364 = vld [vmem:[#allocation8 + $0x50] sm:$0xff]
    %v365 = vld [vmem:[#allocation8 + $0x58] sm:$0xff]
    %v366 = vld [vmem:[#allocation8 + $0x60] sm:$0xff]
    %v367 = vld [vmem:[#allocation8 + $0x68] sm:$0xff]
    %v368 = vld [vmem:[#allocation8 + $0x70] sm:$0xff]
    %v369 = vld [vmem:[#allocation8 + $0x78] sm:$0xff]
    %v370 = vld [vmem:[%s5] sm:$0x1]
    %v372 = vlaneseq
    %v373 = vshrl.u32 %v372, 7
    %v374 = vsub.s32 0, %v373
    %v375 = vrot.slane %v370, %v374
    %377 = vmatprep.subr.mxu0 0.0
    %378 = vmatpush1.msra.mxu0 %v369
    %379 = vmatprep.subr.mxu0 0.0
    %380 = vmatpush1.msra.mxu0 %v368
    %381 = vmatprep.subr.mxu0 0.0
    %382 = vmatpush1.msra.mxu0 %v367
    %383 = vmatprep.subr.mxu0 0.0
    %384 = vmatpush1.msra.mxu0 %v366
    %385 = vmatprep.subr.mxu0 0.0
    %386 = vmatpush1.msra.mxu0 %v365
    %387 = vmatprep.subr.mxu0 0.0
    %388 = vmatpush1.msra.mxu0 %v364
    %389 = vmatprep.subr.mxu0 0.0
    %390 = vmatpush1.msra.mxu0 %v363
    %391 = vmatprep.subr.mxu0 0.0
    %392 = vmatpush1.msra.mxu0 %v362
    %393 = vmatprep.subr.mxu0 0.0
    %394 = vmatpush1.msra.mxu0 %v361
    %395 = vmatprep.subr.mxu0 0.0
    %396 = vmatpush1.msra.mxu0 %v360
    %397 = vmatprep.subr.mxu0 0.0
    %398 = vmatpush1.msra.mxu0 %v359
    %399 = vmatprep.subr.mxu0 0.0
    %400 = vmatpush1.msra.mxu0 %v358
    %401 = vmatprep.subr.mxu0 0.0
    %402 = vmatpush1.msra.mxu0 %v357
    %403 = vmatprep.subr.mxu0 0.0
    %404 = vmatpush1.msra.mxu0 %v356
    %405 = vmatprep.subr.mxu0 0.0
    %406 = vmatpush1.msra.mxu0 %v355
    %407 = vmatprep.subr.mxu0 0.0
    %408 = vmatpush1.msra.mxu0 %v354
    %409 = vmatprep.subr.mxu0 0.0
    %410 = vmatpush2.msra.mxu0 0.0
    %411 = vmatprep.subr.mxu0 0.0
    %412 = vmatpush2.msra.mxu0 0.0
    %413 = vmatprep.subr.mxu0 0.0
    %414 = vmatpush2.msra.mxu0 0.0
    %415 = vmatprep.subr.mxu0 0.0
    %416 = vmatpush2.msra.mxu0 0.0
    %417 = vmatprep.subr.mxu0 0.0
    %418 = vmatpush2.msra.mxu0 0.0
    %419 = vmatprep.subr.mxu0 0.0
    %420 = vmatpush2.msra.mxu0 0.0
    %421 = vmatprep.subr.mxu0 0.0
    %422 = vmatpush2.msra.mxu0 0.0
    %423 = vmatprep.subr.mxu0 0.0
    %424 = vmatpush2.msra.mxu0 0.0
    %425 = vmatprep.subr.mxu0 0.0
    %426 = vmatpush2.msra.mxu0 0.0
    %427 = vmatprep.subr.mxu0 0.0
    %428 = vmatpush2.msra.mxu0 0.0
    %429 = vmatprep.subr.mxu0 0.0
    %430 = vmatpush2.msra.mxu0 0.0
    %431 = vmatprep.subr.mxu0 0.0
    %432 = vmatpush2.msra.mxu0 0.0
    %433 = vmatprep.subr.mxu0 0.0
    %434 = vmatpush2.msra.mxu0 0.0
    %435 = vmatprep.subr.mxu0 0.0
    %436 = vmatpush2.msra.mxu0 0.0
    %437 = vmatprep.subr.mxu0 0.0
    %438 = vmatpush2.msra.mxu0 0.0
    %439 = vmatprep.subr.mxu0 0.0
    %440 = vmatpush2.msra.mxu0 0.0
    %441 = vmatprep.mubr.f32.mxu0 0.0
    %442 = vmatmul.mubr.f32.gmra.mxu0 %v148
    %v443 = vpop.f32.mrf.mxu0
    %v444 = vadd.f32 %v375, %v443
    %v445 = vpop.f32.mrf.mxu0
    %446 = vdwg.mxu0
    %v447 = vmax.f32 %v444, 0.0
    %v448 = vld [vmem:[%s6] sm:$0x1]
    %v450 = vlaneseq
    %v451 = vshrl.u32 %v450, 7
    %v452 = vsub.s32 0, %v451
    %v453 = vrot.slane %v448, %v452
    %v455 = vmul.f32 %v447, %v453
    %vm456 = vcmask 1041408
    %v457 = vsel %vm456, %v455, 0.0
    %458 = vadd.xlane.f32.xlu0 %v457
    %v459 = vpop.xlane.xlu0 %458
    %v460 = vld [vmem:[#allocation3] sm:$0x1]
    %v462 = vlaneseq
    %v463 = vshrl.u32 %v462, 7
    %v464 = vsub.s32 0, %v463
    %v465 = vrot.slane %v460, %v464
    %v467 = vadd.f32 %v459, %v465
    %vm468 = vcmask 1024
    %469 = vst.msk [vmem:[%s8] sm:$0x3] %vm468, %v467
    // Predicated region
    $region53: #{tpu_custom_call.1} parent=1 // pred_check
      _
    $region54: #{tpu_custom_call.1} parent=1 // pred_check_branch
      %471 = sbr.rel (0) target = $region56
    $region55: #{tpu_custom_call.1} parent=1 // pred_region
      _
    $region56: #{tpu_custom_call.1} parent=1 // pred_fallthru
      _
    // Predicated region
    $region57: #{tpu_custom_call.1} parent=1 // pred_check
      _
    $region58: #{tpu_custom_call.1} parent=1 // pred_check_branch
      %473 = sbr.rel (0) target = $region60
    $region59: #{tpu_custom_call.1} parent=1 // pred_region
      _
    $region60: #{tpu_custom_call.1} parent=1 // pred_fallthru
      _
    %474 = vsyncpa [#allocation5], 1
    %475 = vsyncpa [#allocation7], 1

</llo_original>
